<compile_context>
chip_gen: v5e
topology: v5e:2x2
jax: 0.10.0
libtpu: 0.0.40
codegen_flags: <defaults>
</compile_context>

<pallas_src>
import math

import jax
import jax.numpy as jnp
from jax import lax
from jax.experimental import pallas as pl
from jax.experimental.pallas import tpu as pltpu


def _upsample_conv_kernel(x_ref, edge_ref, w_ref, b_ref, out_ref):
    C = out_ref.shape[2]
    tL = out_ref.shape[3]

    x = x_ref[0]                       # (C, tL) f32
    w = w_ref[...]                     # (3C, C) bf16 = [W0; W1; W2]
    b = b_ref[...]                     # (C, 1) f32, broadcasts over length

    # Single fused bf16 MXU matmul, f32 accumulate: m = [W0; W1; W2] @ x -> (3C, tL).
    m = jnp.dot(w, x.astype(jnp.bfloat16), preferred_element_type=jnp.float32)
    m0 = m[0 * C:1 * C, :]             # W0 @ x
    m1 = m[1 * C:2 * C, :]             # W1 @ x
    m2 = m[2 * C:3 * C, :]             # W2 @ x

    # Precomputed halo *products* from the wrapper (zeros at the sequence ends):
    #   edge[:, 0] = W0 @ x[:, t*tL - 1],  edge[:, 1] = W2 @ x[:, (t+1)*tL]
    edge = edge_ref[0, 0]              # (C, 2) f32
    m0_left = edge[:, 0:1]
    m2_right = edge[:, 1:2]

    # Post-matmul one-column shifts along the length (lane) axis.
    m0_shift = jnp.concatenate([m0_left, m0[:, :tL - 1]], axis=1)   # m0 at l-1
    m2_shift = jnp.concatenate([m2[:, 1:], m2_right], axis=1)       # m2 at l+1

    m1b = m1 + b                       # bias added once, shared by both planes
    out_ref[0, 0] = (m0_shift + m1b + m2).astype(out_ref.dtype)     # y[2l]   (even)
    out_ref[0, 1] = (m0 + m1b + m2_shift).astype(out_ref.dtype)     # y[2l+1] (odd)


def _vmem_plan():
    """(pipelined-block budget, vmem_limit_bytes), conservative for v7x's 64 MiB."""
    try:
        cap = pltpu.get_tpu_info().vmem_capacity_bytes
    except Exception:
        cap = 64 << 20                 # assume v7x per-TensorCore VMEM
    budget = min(cap // 2, 40 << 20)
    limit = min((cap * 3) // 4, 96 << 20)
    return budget, limit


def _plan_length_tiling(N, C, L, budget_bytes):
    """Pick (tile_l, padded_L).  tile_l divides padded_L.

    The per-column VMEM estimate counts the double-buffered x/out blocks AND the
    in-kernel intermediates ((3C,tL) f32 matmul result, shifted copies, pre-cast
    outputs, bf16 x), ~56*C bytes per length column.
    """
    col_bytes = 56 * C
    tl_cap = max(128, min(4096, (budget_bytes // col_bytes) // 128 * 128))

    if L % 128 != 0:
        if L * col_bytes <= budget_bytes:
            return L, L                # small unaligned length: one full-length tile
        Lp = pl.cdiv(L, 128) * 128     # long unaligned length: zero-pad (exact, see top)
    else:
        Lp = L

    tl = min(Lp, tl_cap)
    while Lp % tl != 0:
        tl -= 128

    # v7x has 2 TensorCores; make sure the parallel grid has >= 2 steps when possible.
    if N * (Lp // tl) < 2 and Lp % 256 == 0:
        tl = Lp // 2
    return tl, Lp


def upsample_forward(x, weight, bias, with_conv=True, tile_l=None):
    """Equivalent of Upsample.forward for NCL inputs.

    x:      (N, C, L) float32
    weight: (C, C, 3) float32   (Conv1d weight, OIW layout)
    bias:   (C,)      float32
    returns (N, C, 2*L) float32
    """
    N, C, L = x.shape

    if not with_conv:
        # Pure memory op (nearest x2): no matmul hot path -> XLA glue.
        return jnp.repeat(x, 2, axis=-1)

    budget, vmem_limit = _vmem_plan()
    if tile_l is None:
        tile_l, Lp = _plan_length_tiling(N, C, L, budget)
    else:
        if L % tile_l != 0 or (tile_l != L and tile_l % 128 != 0):
            raise ValueError(f"invalid tile_l={tile_l} for L={L}")
        Lp = L
    pad = Lp - L
    xp = jnp.pad(x, ((0, 0), (0, 0), (0, pad))) if pad else x
    n_tiles = Lp // tile_l

    # ---- parameter prep (glue): concatenated (3C, C) bf16 weight + (C, 1) f32 bias ----
    w0 = weight[:, :, 0]
    w1 = weight[:, :, 1]
    w2 = weight[:, :, 2]
    wcat = jnp.concatenate([w0, w1, w2], axis=0).astype(jnp.bfloat16)   # (3C, C)
    b_col = bias.reshape(C, 1).astype(jnp.float32)

    # ---- per-tile halo PRODUCTS (glue; tiny, f32, one batched matmul) ----
    #   edge[n, t, :, 0] = W0 @ x[n, :, t*tL - 1]   (zeros for t == 0)
    #   edge[n, t, :, 1] = W2 @ x[n, :, (t+1)*tL]   (zeros for t == nT-1)
    zeros_col = jnp.zeros((N, C, 1), xp.dtype)
    last_cols = xp[:, :, tile_l - 1::tile_l]                    # (N, C, nT)
    first_cols = xp[:, :, 0::tile_l]                            # (N, C, nT)
    left_x = jnp.concatenate([zeros_col, last_cols[:, :, :n_tiles - 1]], axis=2)
    right_x = jnp.concatenate([first_cols[:, :, 1:], zeros_col], axis=2)
    m0_left = jnp.einsum('oc,nct->nto', w0, left_x,
                         precision=lax.Precision.HIGHEST)
    m2_right = jnp.einsum('oc,nct->nto', w2, right_x,
                          precision=lax.Precision.HIGHEST)
    edge = jnp.stack([m0_left, m2_right], axis=-1).astype(jnp.float32)  # (N, nT, C, 2)

    out = pl.pallas_call(
        _upsample_conv_kernel,
        out_shape=jax.ShapeDtypeStruct((N, 2, C, Lp), x.dtype),
        grid_spec=pltpu.PrefetchScalarGridSpec(
            num_scalar_prefetch=0,
            grid=(N, n_tiles),
            in_specs=[
                pl.BlockSpec((1, C, tile_l), lambda n, t: (n, 0, t)),    # x tile
                pl.BlockSpec((1, 1, C, 2), lambda n, t: (n, t, 0, 0)),   # halo products
                pl.BlockSpec((3 * C, C), lambda n, t: (0, 0)),           # [W0;W1;W2] bf16
                pl.BlockSpec((C, 1), lambda n, t: (0, 0)),               # bias
            ],
            out_specs=pl.BlockSpec((1, 2, C, tile_l), lambda n, t: (n, 0, 0, t)),
        ),
        compiler_params=pltpu.CompilerParams(
            dimension_semantics=("parallel", "parallel"),
            vmem_limit_bytes=vmem_limit,
        ),
    )(xp, edge, wcat, b_col)

    # Even/odd -> interleaved (N, C, 2L): one fusable XLA transpose+reshape pass.
    y = jnp.transpose(out, (0, 2, 3, 1)).reshape(N, C, 2 * Lp)
    if pad:
        y = y[:, :, :2 * L]
    return y


def _reference_forward(x, weight, bias):
    """Pure-JAX reference matching the PyTorch module semantics (f32 HIGHEST)."""
    xu = jnp.repeat(x, 2, axis=-1)                             # nearest, scale=2
    y = lax.conv_general_dilated(
        xu, weight,
        window_strides=(1,),
        padding=[(1, 1)],
        dimension_numbers=("NCW", "OIW", "NCW"),
        precision=lax.Precision.HIGHEST)
    return y + bias[None, :, None]


if __name__ == "__main__":
    def _make_inputs(key, N, C, L):
        k_w, k_b, k_x = jax.random.split(key, 3)
        fan_in = C * 3
        bound = 1.0 / math.sqrt(fan_in)
        weight = jax.random.uniform(k_w, (C, C, 3), jnp.float32, -bound, bound)
        bias = jax.random.uniform(k_b, (C,), jnp.float32, -bound, bound)
        x = jax.random.normal(k_x, (N, C, L), jnp.float32)
        return x, weight, bias

    key = jax.random.PRNGKey(0)
    k1, k2, k3 = jax.random.split(key, 3)

    # bf16 matmul inputs / f32 accumulate -> looser tolerance vs the f32 reference.
    ATOL = 5e-2
    RTOL = 5e-2

    # 1) Small module-consistent shapes (single full-length tile, unaligned L).
    N, C, L = 2, 4, 16
    x, weight, bias = _make_inputs(k1, N, C, L)
    out = jax.block_until_ready(upsample_forward(x, weight, bias, with_conv=True))
    ref = _reference_forward(x, weight, bias)
    assert out.shape == (N, C, 2 * L), out.shape
    assert jnp.allclose(out, ref, atol=ATOL, rtol=RTOL), \
        float(jnp.max(jnp.abs(out - ref)))

    # 2) Multi-tile length axis with explicit tile (exercises the halo products).
    N2, C2, L2 = 2, 8, 512
    x2, w2, b2 = _make_inputs(k2, N2, C2, L2)
    out2 = jax.block_until_ready(upsample_forward(x2, w2, b2, tile_l=128))
    ref2 = _reference_forward(x2, w2, b2)
    assert out2.shape == (N2, C2, 2 * L2), out2.shape
    assert jnp.allclose(out2, ref2, atol=ATOL, rtol=RTOL), \
        float(jnp.max(jnp.abs(out2 - ref2)))

    # 3) Auto planner with N=1: forces >= 2 length tiles (v7x dual-TensorCore path).
    N3, C3, L3 = 1, 8, 256
    x3, w3, b3 = _make_inputs(k3, N3, C3, L3)
    out3 = jax.block_until_ready(upsample_forward(x3, w3, b3))
    ref3 = _reference_forward(x3, w3, b3)
    assert out3.shape == (N3, C3, 2 * L3), out3.shape
    assert jnp.allclose(out3, ref3, atol=ATOL, rtol=RTOL), \
        float(jnp.max(jnp.abs(out3 - ref3)))

    # 4) with_conv=False path (pure nearest x2 upsample).
    out4 = jax.block_until_ready(upsample_forward(x, weight, bias, with_conv=False))
    assert jnp.array_equal(out4, jnp.repeat(x, 2, axis=-1))

    print("KERNEL_OK")
</pallas_src>

<mosaic_0001>
module attributes {stable_mosaic.version = 11 : i64} {
  func.func @_upsample_conv_kernel(%arg0: i32, %arg1: i32, %arg2: memref<1x4x16xf32, #tpu.memory_space<vmem>>, %arg3: memref<1x1x4x2xf32, #tpu.memory_space<vmem>>, %arg4: memref<12x4xbf16, #tpu.memory_space<vmem>>, %arg5: memref<4x1xf32, #tpu.memory_space<vmem>>, %arg6: memref<1x2x4x16xf32, #tpu.memory_space<vmem>>) attributes {dimension_semantics = [#tpu.dimension_semantics<parallel>, #tpu.dimension_semantics<parallel>], iteration_bounds = array<i64: 2, 1>, scalar_prefetch = 0 : i64, scratch_operands = 0 : i64, tpu.core_type = #tpu.core_type<tc>, window_params = [{transform_indices = @transform_0, window_bounds = array<i64: 1, 4, 16>}, {transform_indices = @transform_1, window_bounds = array<i64: 1, 1, 4, 2>}, {pipeline_mode = #tpu.pipeline_mode<synchronous>, transform_indices = @transform_2, window_bounds = array<i64: 12, 4>}, {pipeline_mode = #tpu.pipeline_mode<synchronous>, transform_indices = @transform_3, window_bounds = array<i64: 4, 1>}, {transform_indices = @transform_4, window_bounds = array<i64: 1, 2, 4, 16>}]} {
    %c0 = arith.constant 0 : index
    %c0_0 = arith.constant 0 : index
    %c0_1 = arith.constant 0 : index
    %0 = vector.load %arg2[%c0, %c0_0, %c0_1] : memref<1x4x16xf32, #tpu.memory_space<vmem>>, vector<1x4x16xf32>
    %1 = vector.shape_cast %0 : vector<1x4x16xf32> to vector<4x16xf32>
    %c0_2 = arith.constant 0 : index
    %c0_3 = arith.constant 0 : index
    %2 = vector.load %arg4[%c0_2, %c0_3] : memref<12x4xbf16, #tpu.memory_space<vmem>>, vector<12x4xbf16>
    %c0_4 = arith.constant 0 : index
    %c0_5 = arith.constant 0 : index
    %3 = vector.load %arg5[%c0_4, %c0_5] : memref<4x1xf32, #tpu.memory_space<vmem>>, vector<4x1xf32>
    %4 = arith.truncf %1 : vector<4x16xf32> to vector<4x16xbf16>
    %cst = arith.constant dense<0.000000e+00> : vector<12x16xf32>
    %5 = tpu.matmul %2, %4, %cst {dimension_numbers = #tpu.dot_dimension_numbers<[1], [0], [0], [1], [0, 0, 1, 1], [], []>} : vector<12x4xbf16>, vector<4x16xbf16>, vector<12x16xf32> -> vector<12x16xf32>
    %6 = vector.extract_strided_slice %5 {offsets = [0, 0], sizes = [4, 16], strides = [1, 1]} : vector<12x16xf32> to vector<4x16xf32>
    %7 = vector.extract_strided_slice %5 {offsets = [4, 0], sizes = [4, 16], strides = [1, 1]} : vector<12x16xf32> to vector<4x16xf32>
    %8 = vector.extract_strided_slice %5 {offsets = [8, 0], sizes = [4, 16], strides = [1, 1]} : vector<12x16xf32> to vector<4x16xf32>
    %c0_6 = arith.constant 0 : index
    %c0_7 = arith.constant 0 : index
    %c0_8 = arith.constant 0 : index
    %c0_9 = arith.constant 0 : index
    %9 = vector.load %arg3[%c0_6, %c0_7, %c0_8, %c0_9] : memref<1x1x4x2xf32, #tpu.memory_space<vmem>>, vector<1x1x4x2xf32>
    %10 = vector.shape_cast %9 : vector<1x1x4x2xf32> to vector<4x2xf32>
    %11 = vector.extract_strided_slice %10 {offsets = [0, 0], sizes = [4, 1], strides = [1, 1]} : vector<4x2xf32> to vector<4x1xf32>
    %12 = vector.extract_strided_slice %10 {offsets = [0, 1], sizes = [4, 1], strides = [1, 1]} : vector<4x2xf32> to vector<4x1xf32>
    %13 = vector.extract_strided_slice %6 {offsets = [0, 0], sizes = [4, 15], strides = [1, 1]} : vector<4x16xf32> to vector<4x15xf32>
    %14 = tpu.concatenate %11, %13 in 1 : vector<4x1xf32>, vector<4x15xf32> -> vector<4x16xf32>
    %15 = vector.extract_strided_slice %8 {offsets = [0, 1], sizes = [4, 15], strides = [1, 1]} : vector<4x16xf32> to vector<4x15xf32>
    %16 = tpu.concatenate %15, %12 in 1 : vector<4x15xf32>, vector<4x1xf32> -> vector<4x16xf32>
    %17 = vector.broadcast %3 : vector<4x1xf32> to vector<4x16xf32>
    %18 = arith.addf %7, %17 : vector<4x16xf32>
    %19 = arith.addf %14, %18 : vector<4x16xf32>
    %20 = arith.addf %19, %8 : vector<4x16xf32>
    %c0_10 = arith.constant 0 : index
    %c0_11 = arith.constant 0 : index
    %c0_12 = arith.constant 0 : index
    %c0_13 = arith.constant 0 : index
    %21 = vector.load %arg6[%c0_10, %c0_11, %c0_12, %c0_13] : memref<1x2x4x16xf32, #tpu.memory_space<vmem>>, vector<1x1x4x16xf32>
    %22 = vector.shape_cast %21 : vector<1x1x4x16xf32> to vector<4x16xf32>
    %23 = vector.shape_cast %20 : vector<4x16xf32> to vector<1x1x4x16xf32>
    tpu.vector_store %arg6[%c0_10, %c0_11, %c0_12, %c0_13], %23 {strides = array<i32>} : memref<1x2x4x16xf32, #tpu.memory_space<vmem>>, vector<1x1x4x16xf32>,
    %24 = arith.addf %6, %18 : vector<4x16xf32>
    %25 = arith.addf %24, %16 : vector<4x16xf32>
    %c0_14 = arith.constant 0 : index
    %c1 = arith.constant 1 : index
    %c0_15 = arith.constant 0 : index
    %c0_16 = arith.constant 0 : index
    %26 = vector.load %arg6[%c0_14, %c1, %c0_15, %c0_16] : memref<1x2x4x16xf32, #tpu.memory_space<vmem>>, vector<1x1x4x16xf32>
    %27 = vector.shape_cast %26 : vector<1x1x4x16xf32> to vector<4x16xf32>
    %28 = vector.shape_cast %25 : vector<4x16xf32> to vector<1x1x4x16xf32>
    tpu.vector_store %arg6[%c0_14, %c1, %c0_15, %c0_16], %28 {strides = array<i32>} : memref<1x2x4x16xf32, #tpu.memory_space<vmem>>, vector<1x1x4x16xf32>,
    return
  }
  func.func @transform_0(%arg0: i32, %arg1: i32) -> (i32, i32, i32) {
    %c0_i32 = arith.constant 0 : i32
    %c0_i32_0 = arith.constant 0 : i32
    return %arg0, %c0_i32, %arg1 : i32, i32, i32
  }
  func.func @transform_1(%arg0: i32, %arg1: i32) -> (i32, i32, i32, i32) {
    %c0_i32 = arith.constant 0 : i32
    %c0_i32_0 = arith.constant 0 : i32
    %c0_i32_1 = arith.constant 0 : i32
    return %arg0, %arg1, %c0_i32, %c0_i32_0 : i32, i32, i32, i32
  }
  func.func @transform_2(%arg0: i32, %arg1: i32) -> (i32, i32) {
    %c0_i32 = arith.constant 0 : i32
    %c0_i32_0 = arith.constant 0 : i32
    %c0_i32_1 = arith.constant 0 : i32
    return %c0_i32, %c0_i32_0 : i32, i32
  }
  func.func @transform_3(%arg0: i32, %arg1: i32) -> (i32, i32) {
    %c0_i32 = arith.constant 0 : i32
    %c0_i32_0 = arith.constant 0 : i32
    %c0_i32_1 = arith.constant 0 : i32
    return %c0_i32, %c0_i32_0 : i32, i32
  }
  func.func @transform_4(%arg0: i32, %arg1: i32) -> (i32, i32, i32, i32) {
    %c0_i32 = arith.constant 0 : i32
    %c0_i32_0 = arith.constant 0 : i32
    %c0_i32_1 = arith.constant 0 : i32
    return %arg0, %c0_i32, %c0_i32_0, %arg1 : i32, i32, i32, i32
  }
}

</mosaic_0001>

<llo_original>
// kernel: tpu_custom_call.1
$region0: #{tpu_custom_call.1}
  #allocation0 [shape = 'u32[]', space=smem, size = 0x4, offset = 0x4, fixed_abs, tag = 'smem constant byte address 0x4 - core index']
  #allocation1 [shape = 'u32[72,128]{1,0:T(1,128)}', space=vmem, size = 0x9000, scoped, tag = 'internal scratch']
  %s0 = inlined_call_operand.vmem [shape: f32[2,4,16], index: 0, kind: input, shape index: {}]
  %s1 = inlined_call_operand.vmem [shape: f32[2,1,4,2], index: 1, kind: input, shape index: {}]
  %s2 = inlined_call_operand.vmem [shape: bf16[12,4], index: 2, kind: input, shape index: {}]
  %s3 = inlined_call_operand.vmem [shape: f32[4,1], index: 3, kind: input, shape index: {}]
  %s4 = inlined_call_operand.hbm [shape: f32[2,2,4,16], index: 4, kind: output, shape index: {}]
  %s5 = sld [smem:[#allocation0]]
  $region49: #{tpu_custom_call.1} parent=0
    _
  %s7 = ssub.s32 1, %s5
  %s8 = scalar_select 0, %s7, %s5
  $region1: #{tpu_custom_call.1} parent=0
    #allocation2 [shape = 'u8[8192]{0}', space=vmem, size = 0x2000, scoped, tag = 'output window, operand 0']
    #allocation3 [shape = 's32[2]{0}', space=sflag, size = 0x8, scoped, tag = 'scoped memory for tpu_custom_call.1']
    %9 = vsyncpa [#allocation3], 0
    %s10 = scalar_lea.sflag [#allocation3], 1
    %11 = vsyncpa %s10, 0
    loop: start=0, step=1, limit=4
    $region2: #{tpu_custom_call.1} parent=1 // loop_pre_header
      _
    $region3: #{tpu_custom_call.1} parent=1 // loop_header
      %s13 = sphi 0, %s17
      %p14 = scmp.ge.s32.totalorder %s13, 4
      %s20 = sphi 0, %s32
      %s21 = sphi 0, %s28
      %s22 = sphi 0, %s20
      %s23 = sphi 0, %s21
      %s24 = sphi 0, %s22
      %s25 = sphi 0, %s23
      %s37 = sphi 0, %s39
      %s40 = sphi 0, %s37
      %s41 = sphi 0, %s40
      %s57 = sphi 0, %s41
      %s65 = sphi 0, %s67
      %s68 = sphi 0, %s65
      %s69 = sphi 0, %s68
      %s85 = sphi 0, %s69
      %s89 = sphi 0, %s89
      %s91 = sphi 0, %s89
      %s92 = sphi 0, %s91
      %s106 = sphi 0, %s92
      %s110 = sphi 0, %s110
      %s112 = sphi 0, %s110
      %s113 = sphi 0, %s112
      %s127 = sphi 0, %s113
      %s135 = sphi 0, %s137
      %s138 = sphi 0, %s135
      %s139 = sphi 0, %s138
      %s155 = sphi 0, %s139
    $region4: #{tpu_custom_call.1} parent=1 // loop_header_branch
      %16 = sbr.rel (%p14) target = $region8
    $region5: #{tpu_custom_call.1} parent=1 // loop_body
      %s18 = ssub.s32 %s13, 1
      %s19 = ssub.s32 %s13, 2
      %s26 = sadd.s32 1, %s21
      %p27 = scmp.ge.s32.totalorder %s26, 1
      %s28 = scalar_select %p27, 0, %s26
      %s29 = sadd.s32 1, %s20
      %s30 = scalar_select %p27, %s29, %s20
      %p31 = scmp.ge.s32.totalorder %s30, 2
      %s32 = scalar_select %p31, 0, %s30
      %s33 = ssub.s32 %s20, %s32
      %s34 = ssub.s32 %s21, %s28
      %s35 = sor.u32 %s33, %s34
      %p36 = scmp.eq.s32.totalorder %s35, 0
      %s38 = sadd.s32 %s37, 1
      %s39 = scalar_select %p36, %s37, %s38
      %p42 = pneg %p36
      %p43 = scmp.eq.s32.totalorder %s13, 1
      %p44 = por %p42, %p43
      %p45 = scmp.ne.s32.totalorder %s37, %s40
      %p46 = scmp.eq.s32.totalorder %s13, 0
      %p47 = por %p45, %p46
      %p48 = scmp.ne.s32.totalorder %s37, %s40
      %p49 = scmp.eq.s32.totalorder %s18, 1
      %p50 = por %p48, %p49
      %p51 = scmp.ne.s32.totalorder %s40, %s41
      %p52 = scmp.eq.s32.totalorder %s18, 0
      %p53 = por %p51, %p52
      %p54 = scmp.ne.s32.totalorder %s40, %s41
      %p55 = scmp.eq.s32.totalorder %s19, 1
      %p56 = por %p54, %p55
      %p58 = scmp.ne.s32.totalorder %s41, %s57
      %p59 = scmp.eq.s32.totalorder %s19, 0
      %p60 = por %p58, %p59
      %s61 = ssub.s32 %s20, %s32
      %s62 = ssub.s32 %s21, %s28
      %s63 = sor.u32 %s61, %s62
      %p64 = scmp.eq.s32.totalorder %s63, 0
      %s66 = sadd.s32 %s65, 1
      %s67 = scalar_select %p64, %s65, %s66
      %p70 = pneg %p64
      %p71 = scmp.eq.s32.totalorder %s13, 1
      %p72 = por %p70, %p71
      %p73 = scmp.ne.s32.totalorder %s65, %s68
      %p74 = scmp.eq.s32.totalorder %s13, 0
      %p75 = por %p73, %p74
      %p76 = scmp.ne.s32.totalorder %s65, %s68
      %p77 = scmp.eq.s32.totalorder %s18, 1
      %p78 = por %p76, %p77
      %p79 = scmp.ne.s32.totalorder %s68, %s69
      %p80 = scmp.eq.s32.totalorder %s18, 0
      %p81 = por %p79, %p80
      %p82 = scmp.ne.s32.totalorder %s68, %s69
      %p83 = scmp.eq.s32.totalorder %s19, 1
      %p84 = por %p82, %p83
      %p86 = scmp.ne.s32.totalorder %s69, %s85
      %p87 = scmp.eq.s32.totalorder %s19, 0
      %p88 = por %p86, %p87
      %s90 = sadd.s32 %s89, 1
      %p93 = scmp.eq.s32.totalorder %s13, 1
      %p94 = scmp.ne.s32.totalorder %s89, %s91
      %p95 = scmp.eq.s32.totalorder %s13, 0
      %p96 = por %p94, %p95
      %p97 = scmp.ne.s32.totalorder %s89, %s91
      %p98 = scmp.eq.s32.totalorder %s18, 1
      %p99 = por %p97, %p98
      %p100 = scmp.ne.s32.totalorder %s91, %s92
      %p101 = scmp.eq.s32.totalorder %s18, 0
      %p102 = por %p100, %p101
      %p103 = scmp.ne.s32.totalorder %s91, %s92
      %p104 = scmp.eq.s32.totalorder %s19, 1
      %p105 = por %p103, %p104
      %p107 = scmp.ne.s32.totalorder %s92, %s106
      %p108 = scmp.eq.s32.totalorder %s19, 0
      %p109 = por %p107, %p108
      %s111 = sadd.s32 %s110, 1
      %p114 = scmp.eq.s32.totalorder %s13, 1
      %p115 = scmp.ne.s32.totalorder %s110, %s112
      %p116 = scmp.eq.s32.totalorder %s13, 0
      %p117 = por %p115, %p116
      %p118 = scmp.ne.s32.totalorder %s110, %s112
      %p119 = scmp.eq.s32.totalorder %s18, 1
      %p120 = por %p118, %p119
      %p121 = scmp.ne.s32.totalorder %s112, %s113
      %p122 = scmp.eq.s32.totalorder %s18, 0
      %p123 = por %p121, %p122
      %p124 = scmp.ne.s32.totalorder %s112, %s113
      %p125 = scmp.eq.s32.totalorder %s19, 1
      %p126 = por %p124, %p125
      %p128 = scmp.ne.s32.totalorder %s113, %s127
      %p129 = scmp.eq.s32.totalorder %s19, 0
      %p130 = por %p128, %p129
      %s131 = ssub.s32 %s20, %s32
      %s132 = ssub.s32 %s21, %s28
      %s133 = sor.u32 %s131, %s132
      %p134 = scmp.eq.s32.totalorder %s133, 0
      %s136 = sadd.s32 %s135, 1
      %s137 = scalar_select %p134, %s135, %s136
      %p140 = pneg %p134
      %p141 = scmp.eq.s32.totalorder %s13, 1
      %p142 = por %p140, %p141
      %p143 = scmp.ne.s32.totalorder %s135, %s138
      %p144 = scmp.eq.s32.totalorder %s13, 0
      %p145 = por %p143, %p144
      %p146 = scmp.ne.s32.totalorder %s135, %s138
      %p147 = scmp.eq.s32.totalorder %s18, 1
      %p148 = por %p146, %p147
      %p149 = scmp.ne.s32.totalorder %s138, %s139
      %p150 = scmp.eq.s32.totalorder %s18, 0
      %p151 = por %p149, %p150
      %p152 = scmp.ne.s32.totalorder %s138, %s139
      %p153 = scmp.eq.s32.totalorder %s19, 1
      %p154 = por %p152, %p153
      %p156 = scmp.ne.s32.totalorder %s139, %s155
      %p157 = scmp.eq.s32.totalorder %s19, 0
      %p158 = por %p156, %p157
      %p159 = scmp.le.s32.totalorder 1, %s13
      %p160 = scmp.lt.s32.totalorder %s13, 3
      %p161 = pnand %p159, %p160
      %p162 = pneg %p161
      // Predicated region
      $region9: #{tpu_custom_call.1} parent=5 // pred_check
        _
      $region10: #{tpu_custom_call.1} parent=5 // pred_check_branch
        %164 = sbr.rel (%p161) target = $region12
      $region11: #{tpu_custom_call.1} parent=5 // pred_region
        %s165 = ssub.s32 %s13, 1
        // Predicated region
        $region13: #{tpu_custom_call.1} parent=11 // pred_check
          %p166 = pneg %p102
        $region14: #{tpu_custom_call.1} parent=11 // pred_check_branch
          %168 = sbr.rel (%p166) target = $region16
        $region15: #{tpu_custom_call.1} parent=11 // pred_region
          _
        $region16: #{tpu_custom_call.1} parent=11 // pred_fallthru
          _
        // Predicated region
        $region17: #{tpu_custom_call.1} parent=11 // pred_check
          %p169 = pneg %p123
        $region18: #{tpu_custom_call.1} parent=11 // pred_check_branch
          %171 = sbr.rel (%p169) target = $region20
        $region19: #{tpu_custom_call.1} parent=11 // pred_region
          _
        $region20: #{tpu_custom_call.1} parent=11 // pred_fallthru
          _
      $region12: #{tpu_custom_call.1} parent=5 // pred_fallthru
        _
      %p172 = scmp.lt.s32.totalorder %s13, 2
      // Predicated region
      $region21: #{tpu_custom_call.1} parent=5 // pred_check
        %p173 = pneg %p172
      $region22: #{tpu_custom_call.1} parent=5 // pred_check_branch
        %175 = sbr.rel (%p173) target = $region24
      $region23: #{tpu_custom_call.1} parent=5 // pred_region
        // Predicated region
        $region25: #{tpu_custom_call.1} parent=23 // pred_check
          %p176 = pneg %p47
        $region26: #{tpu_custom_call.1} parent=23 // pred_check_branch
          %178 = sbr.rel (%p176) target = $region28
        $region27: #{tpu_custom_call.1} parent=23 // pred_region
          %p179 = scmp.lt.s32.totalorder %s20, 1
          %s180 = scalar_select %p179, %s20, 1
          %p181 = scmp.lt.s32.totalorder %s21, 0
          %s182 = scalar_select %p181, %s21, 0
          %s183 = sadd.s32 %s182, %s180
          %s184 = smul.addr %s183, 4
          %s185 = scalar_lea.vmem %s0, %s184
        $region28: #{tpu_custom_call.1} parent=23 // pred_fallthru
          _
        // Predicated region
        $region29: #{tpu_custom_call.1} parent=23 // pred_check
          %p186 = pneg %p75
        $region30: #{tpu_custom_call.1} parent=23 // pred_check_branch
          %188 = sbr.rel (%p186) target = $region32
        $region31: #{tpu_custom_call.1} parent=23 // pred_region
          %p189 = scmp.lt.s32.totalorder %s20, 1
          %s190 = scalar_select %p189, %s20, 1
          %p191 = scmp.lt.s32.totalorder %s21, 0
          %s192 = scalar_select %p191, %s21, 0
          %s193 = sadd.s32 %s192, %s190
          %s194 = smul.addr %s193, 4
          %s195 = scalar_lea.vmem %s1, %s194
        $region32: #{tpu_custom_call.1} parent=23 // pred_fallthru
          _
      $region24: #{tpu_custom_call.1} parent=5 // pred_fallthru
        _
      %p196 = scmp.le.s32.totalorder 1, %s13
      %p197 = scmp.lt.s32.totalorder %s13, 3
      %p198 = pnand %p196, %p197
      %p199 = pneg %p198
      // Predicated region
      $region33: #{tpu_custom_call.1} parent=5 // pred_check
        _
      $region34: #{tpu_custom_call.1} parent=5 // pred_check_branch
        %201 = sbr.rel (%p198) target = $region36
      $region35: #{tpu_custom_call.1} parent=5 // pred_region
        %s202 = ssub.s32 %s13, 1
        %p203 = scmp.lt.s32.totalorder %s22, 1
        %s204 = scalar_select %p203, %s22, 1
        %p205 = scmp.lt.s32.totalorder %s23, 0
        %s206 = scalar_select %p205, %s23, 0
        %s207 = sadd.s32 %s206, %s204
        %s208 = smul.addr %s207, 4
        %s209 = scalar_lea.vmem %s0, %s208
        %p210 = pneg %p53
        %p211 = pneg %p50
        %p212 = scmp.lt.s32.totalorder %s22, 1
        %s213 = scalar_select %p212, %s22, 1
        %p214 = scmp.lt.s32.totalorder %s23, 0
        %s215 = scalar_select %p214, %s23, 0
        %s216 = sadd.s32 %s215, %s213
        %s217 = smul.addr %s216, 4
        %s218 = scalar_lea.vmem %s1, %s217
        %p219 = pneg %p81
        %p220 = pneg %p78
        %p221 = pneg %p102
        %p222 = pneg %p99
        %p223 = pneg %p123
        %p224 = pneg %p120
        %p225 = pneg %p151
        %p226 = pneg %p148
        %s227 = sand.u32 %s138, 1
        %s228 = scalar_lea.sflag [#allocation3], %s227
        %s229 = sand.u32 %s138, 1
        %s230 = smul.addr %s229, 8
        %s231 = scalar_lea.vmem [#allocation2], %s230
        %p232 = scmp.lt.s32.totalorder %s22, 1
        %s233 = scalar_select %p232, %s22, 1
        %p234 = scmp.lt.s32.totalorder %s23, 0
        %s235 = scalar_select %p234, %s23, 0
        %s236 = sadd.s32 %s235, %s233
        %s237 = smul.addr %s236, 4
        %s238 = scalar_lea.vmem %s0, %s237
        %p239 = scmp.lt.s32.totalorder %s22, 1
        %s240 = scalar_select %p239, %s22, 1
        %p241 = scmp.lt.s32.totalorder %s23, 0
        %s242 = scalar_select %p241, %s23, 0
        %s243 = sadd.s32 %s242, %s240
        %s244 = smul.addr %s243, 4
        %s245 = scalar_lea.vmem %s1, %s244
        %v247 = vld [vmem:[%s238] sm:$0xf]
        %v248 = vld [vmem:[%s2] sm:$0xf]
        %v249 = vld [vmem:[%s2 + $0x4] sm:$0x3]
        %v250 = vld [vmem:[%s3] sm:$0xf]
        %v251 = vpack.c.bf16 %v247, %v247
        %v254 = vunpack.c.l.b16 %v248
        %v255 = vunpack.c.l.b16 %v249
        %v256 = vpack.c.b16 %v255, %v254
        %vm257 = vcmask 31744
        %v259 = vsel %vm257, %v256, 0
        %vm261 = vcmask 1041408
        %v263 = vsel %vm261, %v251, 0
        %265 = vmatpush.bf16.msra.mxu0 0
        %266 = vmatpush.bf16.msra.mxu0 0
        %267 = vmatpush.bf16.msra.mxu0 0
        %268 = vmatpush.bf16.msra.mxu0 0
        %269 = vmatpush.bf16.msra.mxu0 0
        %270 = vmatpush.bf16.msra.mxu0 0
        %271 = vmatpush.bf16.msra.mxu0 0
        %272 = vmatpush.bf16.msra.mxu0 %v263
        %273 = vmatmul.bf16.gmra.mxu0 %v259
        %v274 = vpop.f32.mrf.mxu0
        %v275 = vadd.f32 0.0, %v274
        %v276 = vpop.f32.mrf.mxu0
        %v277 = vadd.f32 0.0, %v276
        %278 = vdwg.mxu0
        %v279 = vld [vmem:[%s245] sm:$0xf]
        %281 = vrot.lane.b32.xlu0 %v275, 1
        %v282 = vpop.permute.xlu0 %281
        %vm284 = vcmask 7168
        %v285 = vsel %vm284, %v279, %v282
        %287 = vrot.lane.b32.xlu0 %v277, 127
        %v288 = vpop.permute.xlu0 %287
        %291 = vrot.lane.b32.xlu0 %v279, 14
        %v292 = vpop.permute.xlu0 %291
        %vm294 = vcmask 121856
        %v295 = vsel %vm294, %v288, %v292
        %297 = vset.pattern.permute.xlu0 0
        %298 = vperm.xlu0 %297, %v250
        %v299 = vpop.permute.xlu0 %298
        %v300 = vrot.slane %v299, 4
        %v302 = vadd.f32 %v275, %v300
        %v304 = vrot.slane %v302, 4
        %v306 = vadd.f32 %v285, %v304
        %v307 = vadd.f32 %v306, %v277
        %vm308 = vcmask 125952
        %309 = vst.msk [vmem:[%s231] sm:$0xf] %vm308, %v307
        %v310 = vadd.f32 %v275, %v304
        %v311 = vadd.f32 %v310, %v295
        %s312 = scalar_lea.vmem %s231, 4 [#allocation2]
        %313 = vst.msk [vmem:[%s312] sm:$0xf] %vm308, %v311
        %s314 = sand.u32 %s138, 1
        %s315 = scalar_lea.sflag [#allocation3], %s314
        %s316 = sand.u32 %s138, 1
        %s317 = smul.addr %s316, 8
        %s318 = scalar_lea.vmem [#allocation2], %s317
        // Predicated region
        $region37: #{tpu_custom_call.1} parent=35 // pred_check
          %p319 = pneg %p148
        $region38: #{tpu_custom_call.1} parent=35 // pred_check_branch
          %321 = sbr.rel (%p319) target = $region40
        $region39: #{tpu_custom_call.1} parent=35 // pred_region
          %323 = vsyncadd %s315, 0
          %s324 = smul.addr %s22, 2
          %s325 = sadd.s32 %s23, %s324
          %s326 = smul.addr %s325, 4
          %s327 = scalar_lea.hbm %s4, %s326
          %s328 = sshll.u32 %s318, 4
          %s329 = int_to_ptr.vmem [resolvable:$true] %s328
          %s330 = sshll.u32 %s327, 4
          %s331 = int_to_ptr.hbm [resolvable:$true] %s330
          %336 = dma.vmem_to_hbm [thread:$0]  %s329, 128, %s331, %s315, 64, 64, 4
        $region40: #{tpu_custom_call.1} parent=35 // pred_fallthru
          _
      $region36: #{tpu_custom_call.1} parent=5 // pred_fallthru
        _
      %p337 = scmp.le.s32.totalorder 2, %s13
      // Predicated region
      $region41: #{tpu_custom_call.1} parent=5 // pred_check
        %p338 = pneg %p337
      $region42: #{tpu_custom_call.1} parent=5 // pred_check_branch
        %340 = sbr.rel (%p338) target = $region44
      $region43: #{tpu_custom_call.1} parent=5 // pred_region
        %s341 = ssub.s32 %s13, 2
        // Predicated region
        $region45: #{tpu_custom_call.1} parent=43 // pred_check
          %p342 = pneg %p154
        $region46: #{tpu_custom_call.1} parent=43 // pred_check_branch
          %344 = sbr.rel (%p342) target = $region48
        $region47: #{tpu_custom_call.1} parent=43 // pred_region
          %s345 = sand.u32 %s139, 1
          %s346 = scalar_lea.sflag [#allocation3], %s345
          %s347 = sand.u32 %s139, 1
          %s348 = smul.addr %s347, 8
          %s349 = scalar_lea.vmem [#allocation2], %s348
          %351 = dma.done %s346, 128
        $region48: #{tpu_custom_call.1} parent=43 // pred_fallthru
          _
      $region44: #{tpu_custom_call.1} parent=5 // pred_fallthru
        _
    $region6: #{tpu_custom_call.1} parent=1 // loop_footer
      %s17 = sadd.s32 1, %s13
    $region7: #{tpu_custom_call.1} parent=1 // loop_footer_branch
      %12 = sbr.rel target = $region3
    $region8: #{tpu_custom_call.1} parent=1 // loop_exit
      _
    %352 = vsyncpa [#allocation3], 1
    %s353 = scalar_lea.sflag [#allocation3], 1
    %354 = vsyncpa %s353, 1

</llo_original>
